<compile_context>
chip_gen: v7x
topology: tpu7x:2x2x1
jax: 0.10.0
libtpu: 0.0.40
codegen_flags: <defaults>
</compile_context>

<pallas_src>
import functools
import math

import jax
import jax.numpy as jnp
from jax.experimental import pallas as pl
from jax.experimental.pallas import tpu as pltpu


def _round_up(v, m):
    return ((v + m - 1) // m) * m


def _vmem_capacity_bytes():
    """Physical VMEM of the local TensorCore; conservative 64 MiB (v7x) fallback."""
    try:
        info = pltpu.get_tpu_info()
        for attr in ("vmem_capacity_bytes", "vmem_size_bytes", "vmem_bytes"):
            v = getattr(info, attr, None)
            if v:
                return int(v)
    except Exception:
        pass
    return 64 << 20


def _lgamma_p1(x):
    """log Gamma(x + 1) for x >= 0 (float32).

    Recurrence shift by 4 + 3-term Stirling series: 2 EUP logs and 1 approx
    reciprocal per element; everything else is cheap VALU mul/add.
        lgamma(z) = lgamma(z + 4) - log(z (z+1) (z+2) (z+3)),   z = x + 1
    w = z + 4 >= 5 keeps the Stirling truncation < 1e-7 and the approx-
    reciprocal contribution < ~5e-6.  The shift product ~ z^4 stays inside
    float32 range for x < ~4.3e9 (fine for count data).
    """
    z = x + 1.0
    shift = jnp.log(z * (z + 1.0) * (z + 2.0) * (z + 3.0))
    w = z + 4.0
    inv = pl.reciprocal(w, approx=True)      # only feeds the tiny Stirling series
    inv2 = inv * inv
    series = inv * (1.0 / 12.0 - inv2 * (1.0 / 360.0 - inv2 * (1.0 / 1260.0)))
    half_log_2pi = 0.9189385332046727        # 0.5 * log(2*pi)
    return (w - 0.5) * jnp.log(w) - w + half_log_2pi + series - shift


def _poisson_kernel_dense(x_ref, rate_ref, log_rate_ref, o_ref, *, mult):
    """Lane-dense variant: one expansion, lgamma on the expanded tile.

    Used when ceil(D*mult/128) == ceil(D/128): the expanded tile occupies the
    same number of lane-vregs as the narrow one, so EUP work is unchanged
    while one interleave pass and the lane waste of the narrow lgamma vanish.
    """
    x = x_ref[...]                                        # (TN, D) f32
    tn, d = x.shape
    xe = jnp.broadcast_to(x[:, :, None], (tn, d, mult)).reshape(tn, d * mult)
    out = xe * log_rate_ref[...] - rate_ref[...] - _lgamma_p1(xe)
    o_ref[...] = out.astype(o_ref.dtype)
    # TODO(synk): dropout > 0 Bernoulli masking not implemented (module
    # default dropout=0.0 makes Leaf.forward the identity).


def _poisson_kernel_wide(x_ref, rate_ref, log_rate_ref, o_ref, *, mult):
    """Wide variant (large D*mult): lgamma on the narrow tile, expand both terms."""
    x = x_ref[...]                                        # (TN, D) f32
    lg = _lgamma_p1(x)                                    # (TN, D)
    tn, d = x.shape
    xe = jnp.broadcast_to(x[:, :, None], (tn, d, mult)).reshape(tn, d * mult)
    lge = jnp.broadcast_to(lg[:, :, None], (tn, d, mult)).reshape(tn, d * mult)
    out = xe * log_rate_ref[...] - rate_ref[...] - lge
    o_ref[...] = out.astype(o_ref.dtype)


def poisson_leaf(x, rate, *, tile_n=None, out_dtype=jnp.float32):
    """Poisson leaf log-probabilities.

    x    : (N, D) float32 (count-valued, >= 0)
    rate : (1, D, M) float32 (strictly positive)
    returns (N, D, M) out_dtype (default float32; pass bfloat16 to halve the
    store traffic if downstream layers tolerate it -- internal math stays f32).
    """
    N, D = x.shape
    M = rate.shape[-1]

    # ---- lane layout: pad the multiplicity axis so D*Mk is a multiple of 128
    # (full-lane stores) whenever that does not increase the lane-vreg count.
    q = 128 // math.gcd(D, 128)             # smallest Mk step with D*Mk % 128 == 0
    Mp = _round_up(M, q)
    lane_dense = (D * Mp) <= _round_up(D, 128)
    Mk = Mp if lane_dense else M
    C = D * Mk                              # kernel output columns

    rate2 = rate.reshape(D, M).astype(jnp.float32)
    log_rate2 = jnp.log(rate2)              # precomputed once (saves in-kernel EUP)
    if Mk != M:
        pad = ((0, 0), (0, Mk - M))
        rate2 = jnp.pad(rate2, pad)         # pad with 0 -> padded cols stay finite
        log_rate2 = jnp.pad(log_rate2, pad)
    rate_row = rate2.reshape(1, C)
    log_rate_row = log_rate2.reshape(1, C)

    # ---- batch tile: multiple of 8 sublanes, sized from D*Mk and the actual
    # chip VMEM (v7x: 64 MiB per TC), with >=2 grid steps for megacore.
    cap = _vmem_capacity_bytes()
    budget = int(cap * 0.75)                # ~25% headroom (Mosaic scratch, relayouts)
    param_bytes = 2 * 2 * 4 * C             # rate + log(rate) rows, double-buffered
    # per batch row: double-buffered in/out tiles + ~2 out-sized relayout temps
    per_row_bytes = 4 * (2 * D + 4 * C)
    tn_cap = max(8, ((budget - param_bytes) // per_row_bytes) // 8 * 8)

    n8 = _round_up(max(N, 1), 8)
    want = 2048 if tile_n is None else max(8, _round_up(tile_n, 8))
    tn = min(want, n8, tn_cap)
    if N >= 16:                             # keep >=2 grid steps (v7x has 2 TCs)
        tn = min(tn, _round_up(-(-N // 2), 8))
    tn = max(8, tn)

    n_pad = _round_up(N, tn)
    x_p = x.astype(jnp.float32)
    if n_pad != N:
        # pad rows with x = 0 (inside the Poisson support -> no NaNs produced)
        x_p = jnp.pad(x_p, ((0, n_pad - N), (0, 0)))
    grid = (n_pad // tn,)

    vmem_need = param_bytes + per_row_bytes * tn + (2 << 20)
    vmem_limit = int(min(max(vmem_need, 4 << 20), int(cap * 0.85)))

    kernel_fn = _poisson_kernel_dense if lane_dense else _poisson_kernel_wide
    kernel = functools.partial(kernel_fn, mult=Mk)

    out2d = pl.pallas_call(
        kernel,
        out_shape=jax.ShapeDtypeStruct((n_pad, C), out_dtype),
        grid=grid,
        in_specs=[
            pl.BlockSpec((tn, D), lambda i: (i, 0)),        # x tile (pipelined)
            pl.BlockSpec((1, C), lambda i: (0, 0)),         # rate (grid-invariant)
            pl.BlockSpec((1, C), lambda i: (0, 0)),         # log(rate) (grid-invariant)
        ],
        out_specs=pl.BlockSpec((tn, C), lambda i: (i, 0)),  # lane-dense output slab
        compiler_params=pltpu.CompilerParams(
            dimension_semantics=("parallel",),
            vmem_limit_bytes=vmem_limit,
        ),
    )(x_p, rate_row, log_rate_row)

    # (N, D*Mk) -> (N, D, Mk): row-major, metadata-only reshape; then drop any
    # multiplicity padding.
    out = out2d[:N].reshape(N, D, Mk)
    if Mk != M:
        out = out[:, :, :M]
    return out


if __name__ == "__main__":
    key = jax.random.PRNGKey(0)
    k_x, k_rate = jax.random.split(key)

    N, D, M = 8, 16, 8  # batch, in_features, multiplicity

    # Count-valued inputs (Poisson support), as float32.
    x = jax.random.randint(k_x, (N, D), 0, 10).astype(jnp.float32)
    # Parameter init mirroring torch.rand(1, in_features, multiplicity),
    # clamped away from 0 to keep log(rate) finite.
    rate = jax.random.uniform(k_rate, (1, D, M), dtype=jnp.float32,
                              minval=1e-3, maxval=1.0)

    out = poisson_leaf(x, rate)
    out = jax.block_until_ready(out)

    # Plain-JAX reference for sanity.
    from jax.scipy.special import gammaln
    ref = x[:, :, None] * jnp.log(rate) - rate - gammaln(x[:, :, None] + 1.0)
    assert out.shape == (N, D, M), out.shape
    assert jnp.allclose(out, ref.astype(jnp.float32), atol=1e-4, rtol=1e-4), (
        float(jnp.max(jnp.abs(out - ref))))

    print("KERNEL_OK")
</pallas_src>

<mosaic_0001>
module attributes {stable_mosaic.version = 11 : i64} {
  func.func @_poisson_kernel_dense(%arg0: i32, %arg1: memref<8x16xf32, #tpu.memory_space<vmem>>, %arg2: memref<1x128xf32, #tpu.memory_space<vmem>>, %arg3: memref<1x128xf32, #tpu.memory_space<vmem>>, %arg4: memref<8x128xf32, #tpu.memory_space<vmem>>) attributes {dimension_semantics = [#tpu.dimension_semantics<parallel>], iteration_bounds = array<i64: 1>, scalar_prefetch = 0 : i64, scratch_operands = 0 : i64, tpu.core_type = #tpu.core_type<tc>, window_params = [{transform_indices = @transform_0, window_bounds = array<i64: 8, 16>}, {pipeline_mode = #tpu.pipeline_mode<synchronous>, transform_indices = @transform_1, window_bounds = array<i64: 1, 128>}, {pipeline_mode = #tpu.pipeline_mode<synchronous>, transform_indices = @transform_2, window_bounds = array<i64: 1, 128>}, {transform_indices = @transform_3, window_bounds = array<i64: 8, 128>}]} {
    %c0 = arith.constant 0 : index
    %c0_0 = arith.constant 0 : index
    %0 = vector.load %arg1[%c0, %c0_0] : memref<8x16xf32, #tpu.memory_space<vmem>>, vector<8x16xf32>
    %1 = vector.shape_cast %0 : vector<8x16xf32> to vector<8x16x1xf32>
    %2 = vector.shape_cast %1 : vector<8x16x1xf32> to vector<8x16x1xf32>
    %3 = vector.broadcast %2 : vector<8x16x1xf32> to vector<8x16x8xf32>
    %4 = vector.shape_cast %3 : vector<8x16x8xf32> to vector<8x128xf32>
    %c0_1 = arith.constant 0 : index
    %c0_2 = arith.constant 0 : index
    %5 = vector.load %arg3[%c0_1, %c0_2] : memref<1x128xf32, #tpu.memory_space<vmem>>, vector<1x128xf32>
    %6 = vector.broadcast %5 : vector<1x128xf32> to vector<8x128xf32>
    %7 = arith.mulf %4, %6 : vector<8x128xf32>
    %c0_3 = arith.constant 0 : index
    %c0_4 = arith.constant 0 : index
    %8 = vector.load %arg2[%c0_3, %c0_4] : memref<1x128xf32, #tpu.memory_space<vmem>>, vector<1x128xf32>
    %9 = vector.broadcast %8 : vector<1x128xf32> to vector<8x128xf32>
    %10 = arith.subf %7, %9 : vector<8x128xf32>
    %cst = arith.constant 1.000000e+00 : f32
    %11 = vector.broadcast %cst : f32 to vector<8x128xf32>
    %12 = arith.addf %4, %11 : vector<8x128xf32>
    %cst_5 = arith.constant 1.000000e+00 : f32
    %13 = vector.broadcast %cst_5 : f32 to vector<8x128xf32>
    %14 = arith.addf %12, %13 : vector<8x128xf32>
    %15 = arith.mulf %12, %14 : vector<8x128xf32>
    %cst_6 = arith.constant 2.000000e+00 : f32
    %16 = vector.broadcast %cst_6 : f32 to vector<8x128xf32>
    %17 = arith.addf %12, %16 : vector<8x128xf32>
    %18 = arith.mulf %15, %17 : vector<8x128xf32>
    %cst_7 = arith.constant 3.000000e+00 : f32
    %19 = vector.broadcast %cst_7 : f32 to vector<8x128xf32>
    %20 = arith.addf %12, %19 : vector<8x128xf32>
    %21 = arith.mulf %18, %20 : vector<8x128xf32>
    %22 = math.log %21 : vector<8x128xf32>
    %cst_8 = arith.constant 4.000000e+00 : f32
    %23 = vector.broadcast %cst_8 : f32 to vector<8x128xf32>
    %24 = arith.addf %12, %23 : vector<8x128xf32>
    %25 = tpu.reciprocal %24 {approx = true} : vector<8x128xf32> -> vector<8x128xf32>
    %26 = arith.mulf %25, %25 : vector<8x128xf32>
    %cst_9 = arith.constant 7.93650805E-4 : f32
    %27 = vector.broadcast %cst_9 : f32 to vector<8x128xf32>
    %28 = arith.mulf %26, %27 : vector<8x128xf32>
    %cst_10 = arith.constant 0.00277777785 : f32
    %29 = vector.broadcast %cst_10 : f32 to vector<8x128xf32>
    %30 = arith.subf %29, %28 : vector<8x128xf32>
    %31 = arith.mulf %26, %30 : vector<8x128xf32>
    %cst_11 = arith.constant 0.0833333358 : f32
    %32 = vector.broadcast %cst_11 : f32 to vector<8x128xf32>
    %33 = arith.subf %32, %31 : vector<8x128xf32>
    %34 = arith.mulf %25, %33 : vector<8x128xf32>
    %cst_12 = arith.constant 5.000000e-01 : f32
    %35 = vector.broadcast %cst_12 : f32 to vector<8x128xf32>
    %36 = arith.subf %24, %35 : vector<8x128xf32>
    %37 = math.log %24 : vector<8x128xf32>
    %38 = arith.mulf %36, %37 : vector<8x128xf32>
    %39 = arith.subf %38, %24 : vector<8x128xf32>
    %cst_13 = arith.constant 0.918938517 : f32
    %40 = vector.broadcast %cst_13 : f32 to vector<8x128xf32>
    %41 = arith.addf %39, %40 : vector<8x128xf32>
    %42 = arith.addf %41, %34 : vector<8x128xf32>
    %43 = arith.subf %42, %22 : vector<8x128xf32>
    %44 = arith.subf %10, %43 : vector<8x128xf32>
    %c0_14 = arith.constant 0 : index
    %c0_15 = arith.constant 0 : index
    %45 = vector.load %arg4[%c0_14, %c0_15] : memref<8x128xf32, #tpu.memory_space<vmem>>, vector<8x128xf32>
    tpu.vector_store %arg4[%c0_14, %c0_15], %44 {strides = array<i32>} : memref<8x128xf32, #tpu.memory_space<vmem>>, vector<8x128xf32>,
    return
  }
  func.func @transform_0(%arg0: i32) -> (i32, i32) {
    %c0_i32 = arith.constant 0 : i32
    %c0_i32_0 = arith.constant 0 : i32
    return %arg0, %c0_i32 : i32, i32
  }
  func.func @transform_1(%arg0: i32) -> (i32, i32) {
    %c0_i32 = arith.constant 0 : i32
    %c0_i32_0 = arith.constant 0 : i32
    %c0_i32_1 = arith.constant 0 : i32
    return %c0_i32, %c0_i32_0 : i32, i32
  }
  func.func @transform_2(%arg0: i32) -> (i32, i32) {
    %c0_i32 = arith.constant 0 : i32
    %c0_i32_0 = arith.constant 0 : i32
    %c0_i32_1 = arith.constant 0 : i32
    return %c0_i32, %c0_i32_0 : i32, i32
  }
  func.func @transform_3(%arg0: i32) -> (i32, i32) {
    %c0_i32 = arith.constant 0 : i32
    %c0_i32_0 = arith.constant 0 : i32
    return %arg0, %c0_i32 : i32, i32
  }
}

</mosaic_0001>

<llo_original>
// kernel: tpu_custom_call.1
$region0: #{tpu_custom_call.1}
  #allocation0 [shape = 'u32[]', space=smem, size = 0x4, offset = 0x4, fixed_abs, tag = 'smem constant byte address 0x4 - core index']
  #allocation1 [shape = 'u32[144,128]{1,0:T(1,128)}', space=vmem, size = 0x12000, scoped, tag = 'internal scratch']
  %s0 = inlined_call_operand.hbm [shape: f32[8,16], index: 0, kind: input, shape index: {}]
  %s1 = inlined_call_operand.vmem [shape: f32[1,128], index: 1, kind: input, shape index: {}]
  %s2 = inlined_call_operand.vmem [shape: f32[1,128], index: 2, kind: input, shape index: {}]
  %s3 = inlined_call_operand.hbm [shape: f32[8,128], index: 3, kind: output, shape index: {}]
  %s4 = sld [smem:[#allocation0]]
  $region26: #{tpu_custom_call.1} parent=0
    _
  %s6 = ssub.s32 1, %s4
  %s7 = scalar_select 0, %s6, %s4
  $region1: #{tpu_custom_call.1} parent=0
    #allocation2 [shape = 'u8[4096]{0}', space=vmem, size = 0x1000, scoped, tag = 'input window, operand 0, single buffered']
    #allocation3 [shape = 's32[1]{0}', space=sflag, size = 0x4, scoped, tag = 'scoped memory for tpu_custom_call.1']
    #allocation4 [shape = 's32[1]{0}', space=sflag, size = 0x4, scoped, tag = 'scoped memory for tpu_custom_call.1']
    #allocation5 [shape = 'u8[4096]{0}', space=vmem, size = 0x1000, scoped, tag = 'output window, operand 0, single buffered']
    %8 = vsyncpa [#allocation3], 0
    %9 = vsyncpa [#allocation4], 0
    // Predicated region
    $region2: #{tpu_custom_call.1} parent=1 // pred_check
      _
    $region3: #{tpu_custom_call.1} parent=1 // pred_check_branch
      %11 = sbr.rel (0) target = $region5
    $region4: #{tpu_custom_call.1} parent=1 // pred_region
      %s13 = ssub.s32 128, 128
      %14 = vsyncadd [#allocation3], %s13
      %s16 = sshll.u32 [#allocation2], 4
      %s17 = int_to_ptr.vmem [resolvable:$true] %s16
      %19 = dma.hbm_to_vmem [thread:$0]  %s0, 128, %s17, [#allocation3]
    $region5: #{tpu_custom_call.1} parent=1 // pred_fallthru
      _
    // Predicated region
    $region6: #{tpu_custom_call.1} parent=1 // pred_check
      _
    $region7: #{tpu_custom_call.1} parent=1 // pred_check_branch
      %21 = sbr.rel (0) target = $region9
    $region8: #{tpu_custom_call.1} parent=1 // pred_region
      _
    $region9: #{tpu_custom_call.1} parent=1 // pred_fallthru
      _
    // Predicated region
    $region10: #{tpu_custom_call.1} parent=1 // pred_check
      _
    $region11: #{tpu_custom_call.1} parent=1 // pred_check_branch
      %23 = sbr.rel (0) target = $region13
    $region12: #{tpu_custom_call.1} parent=1 // pred_region
      _
    $region13: #{tpu_custom_call.1} parent=1 // pred_fallthru
      _
    // Predicated region
    $region14: #{tpu_custom_call.1} parent=1 // pred_check
      _
    $region15: #{tpu_custom_call.1} parent=1 // pred_check_branch
      %25 = sbr.rel (0) target = $region17
    $region16: #{tpu_custom_call.1} parent=1 // pred_region
      %26 = dma.done [#allocation3], 128
    $region17: #{tpu_custom_call.1} parent=1 // pred_fallthru
      _
    %v27 = vld [vmem:[#allocation2] sm:$0xff]
    %v28 = vlaneseq
    %v29 = vshrl.u32 %v28, 7
    %v30 = vsub.s32 0, %v29
    %v31 = vrot.slane %v27, %v30
    %33 = vbcast.lane.b32.xlu0 %v31, 256
    %v34 = vpop.permute.xlu0 %33
    %s36 = sor.u32 256, 8
    %37 = vbcast.lane.b32.xlu0 %v31, %s36
    %v38 = vpop.permute.xlu0 %37
    %v39 = vlaneseq
    %v40 = vshrl.u32 %v39, 7
    %v41 = vsub.s32 1, %v40
    %v42 = vrot.slane %v27, %v41
    %44 = vbcast.lane.b32.xlu0 %v42, 256
    %v45 = vpop.permute.xlu0 %44
    %s47 = sor.u32 256, 8
    %48 = vbcast.lane.b32.xlu0 %v42, %s47
    %v49 = vpop.permute.xlu0 %48
    %v50 = vlaneseq
    %v51 = vshrl.u32 %v50, 7
    %v52 = vsub.s32 2, %v51
    %v53 = vrot.slane %v27, %v52
    %55 = vbcast.lane.b32.xlu0 %v53, 256
    %v56 = vpop.permute.xlu0 %55
    %s58 = sor.u32 256, 8
    %59 = vbcast.lane.b32.xlu0 %v53, %s58
    %v60 = vpop.permute.xlu0 %59
    %v61 = vlaneseq
    %v62 = vshrl.u32 %v61, 7
    %v63 = vsub.s32 3, %v62
    %v64 = vrot.slane %v27, %v63
    %66 = vbcast.lane.b32.xlu0 %v64, 256
    %v67 = vpop.permute.xlu0 %66
    %s69 = sor.u32 256, 8
    %70 = vbcast.lane.b32.xlu0 %v64, %s69
    %v71 = vpop.permute.xlu0 %70
    %v72 = vlaneseq
    %v73 = vshrl.u32 %v72, 7
    %v74 = vsub.s32 4, %v73
    %v75 = vrot.slane %v27, %v74
    %77 = vbcast.lane.b32.xlu0 %v75, 256
    %v78 = vpop.permute.xlu0 %77
    %s80 = sor.u32 256, 8
    %81 = vbcast.lane.b32.xlu0 %v75, %s80
    %v82 = vpop.permute.xlu0 %81
    %v83 = vlaneseq
    %v84 = vshrl.u32 %v83, 7
    %v85 = vsub.s32 5, %v84
    %v86 = vrot.slane %v27, %v85
    %88 = vbcast.lane.b32.xlu0 %v86, 256
    %v89 = vpop.permute.xlu0 %88
    %s91 = sor.u32 256, 8
    %92 = vbcast.lane.b32.xlu0 %v86, %s91
    %v93 = vpop.permute.xlu0 %92
    %v94 = vlaneseq
    %v95 = vshrl.u32 %v94, 7
    %v96 = vsub.s32 6, %v95
    %v97 = vrot.slane %v27, %v96
    %99 = vbcast.lane.b32.xlu0 %v97, 256
    %v100 = vpop.permute.xlu0 %99
    %s102 = sor.u32 256, 8
    %103 = vbcast.lane.b32.xlu0 %v97, %s102
    %v104 = vpop.permute.xlu0 %103
    %v105 = vlaneseq
    %v106 = vshrl.u32 %v105, 7
    %v107 = vsub.s32 7, %v106
    %v108 = vrot.slane %v27, %v107
    %110 = vbcast.lane.b32.xlu0 %v108, 256
    %v111 = vpop.permute.xlu0 %110
    %s113 = sor.u32 256, 8
    %114 = vbcast.lane.b32.xlu0 %v108, %s113
    %v115 = vpop.permute.xlu0 %114
    %v116 = vcombine.low %v34, %v56
    %v117 = vcombine.high %v34, %v56
    %v119 = vunpack.c.l.s4 1983009808
    %v120 = vunpack.c.0.s8 %v119
    %v121 = vlaneseq
    %v122 = vshrl.u32 %v121, 7
    %v123 = vsub.s32 %v120, %v122
    %v124 = vrot.slane %v116, %v123
    %v126 = vunpack.c.l.s4 1983009808
    %v127 = vunpack.c.0.s8 %v126
    %v128 = vlaneseq
    %v129 = vshrl.u32 %v128, 7
    %v130 = vsub.s32 %v127, %v129
    %v131 = vrot.slane %v117, %v130
    %v132 = vcombine.low %v45, %v67
    %v133 = vcombine.high %v45, %v67
    %v135 = vunpack.c.l.s4 1983009808
    %v136 = vunpack.c.0.s8 %v135
    %v137 = vlaneseq
    %v138 = vshrl.u32 %v137, 7
    %v139 = vsub.s32 %v136, %v138
    %v140 = vrot.slane %v132, %v139
    %v142 = vunpack.c.l.s4 1983009808
    %v143 = vunpack.c.0.s8 %v142
    %v144 = vlaneseq
    %v145 = vshrl.u32 %v144, 7
    %v146 = vsub.s32 %v143, %v145
    %v147 = vrot.slane %v133, %v146
    %v148 = vcombine.low %v78, %v100
    %v149 = vcombine.high %v78, %v100
    %v151 = vunpack.c.l.s4 1983009808
    %v152 = vunpack.c.0.s8 %v151
    %v153 = vlaneseq
    %v154 = vshrl.u32 %v153, 7
    %v155 = vsub.s32 %v152, %v154
    %v156 = vrot.slane %v148, %v155
    %v158 = vunpack.c.l.s4 1983009808
    %v159 = vunpack.c.0.s8 %v158
    %v160 = vlaneseq
    %v161 = vshrl.u32 %v160, 7
    %v162 = vsub.s32 %v159, %v161
    %v163 = vrot.slane %v149, %v162
    %v164 = vcombine.low %v89, %v111
    %v165 = vcombine.high %v89, %v111
    %v167 = vunpack.c.l.s4 1983009808
    %v168 = vunpack.c.0.s8 %v167
    %v169 = vlaneseq
    %v170 = vshrl.u32 %v169, 7
    %v171 = vsub.s32 %v168, %v170
    %v172 = vrot.slane %v164, %v171
    %v174 = vunpack.c.l.s4 1983009808
    %v175 = vunpack.c.0.s8 %v174
    %v176 = vlaneseq
    %v177 = vshrl.u32 %v176, 7
    %v178 = vsub.s32 %v175, %v177
    %v179 = vrot.slane %v165, %v178
    %v180 = vcombine.low %v124, %v140
    %v181 = vcombine.high %v124, %v140
    %v183 = vunpack.c.l.s4 1934713408
    %v184 = vunpack.c.0.s8 %v183
    %v185 = vlaneseq
    %v186 = vshrl.u32 %v185, 7
    %v187 = vsub.s32 %v184, %v186
    %v188 = vrot.slane %v180, %v187
    %v190 = vunpack.c.l.s4 1934713408
    %v191 = vunpack.c.0.s8 %v190
    %v192 = vlaneseq
    %v193 = vshrl.u32 %v192, 7
    %v194 = vsub.s32 %v191, %v193
    %v195 = vrot.slane %v181, %v194
    %v196 = vcombine.low %v131, %v147
    %v197 = vcombine.high %v131, %v147
    %v199 = vunpack.c.l.s4 1934713408
    %v200 = vunpack.c.0.s8 %v199
    %v201 = vlaneseq
    %v202 = vshrl.u32 %v201, 7
    %v203 = vsub.s32 %v200, %v202
    %v204 = vrot.slane %v196, %v203
    %v206 = vunpack.c.l.s4 1934713408
    %v207 = vunpack.c.0.s8 %v206
    %v208 = vlaneseq
    %v209 = vshrl.u32 %v208, 7
    %v210 = vsub.s32 %v207, %v209
    %v211 = vrot.slane %v197, %v210
    %v212 = vcombine.low %v156, %v172
    %v213 = vcombine.high %v156, %v172
    %v215 = vunpack.c.l.s4 1934713408
    %v216 = vunpack.c.0.s8 %v215
    %v217 = vlaneseq
    %v218 = vshrl.u32 %v217, 7
    %v219 = vsub.s32 %v216, %v218
    %v220 = vrot.slane %v212, %v219
    %v222 = vunpack.c.l.s4 1934713408
    %v223 = vunpack.c.0.s8 %v222
    %v224 = vlaneseq
    %v225 = vshrl.u32 %v224, 7
    %v226 = vsub.s32 %v223, %v225
    %v227 = vrot.slane %v213, %v226
    %v228 = vcombine.low %v163, %v179
    %v229 = vcombine.high %v163, %v179
    %v231 = vunpack.c.l.s4 1934713408
    %v232 = vunpack.c.0.s8 %v231
    %v233 = vlaneseq
    %v234 = vshrl.u32 %v233, 7
    %v235 = vsub.s32 %v232, %v234
    %v236 = vrot.slane %v228, %v235
    %v238 = vunpack.c.l.s4 1934713408
    %v239 = vunpack.c.0.s8 %v238
    %v240 = vlaneseq
    %v241 = vshrl.u32 %v240, 7
    %v242 = vsub.s32 %v239, %v241
    %v243 = vrot.slane %v229, %v242
    %v244 = vcombine.low %v188, %v220
    %v245 = vcombine.high %v188, %v220
    %v246 = vcombine.low %v195, %v227
    %v247 = vcombine.high %v195, %v227
    %v248 = vcombine.low %v204, %v236
    %v249 = vcombine.high %v204, %v236
    %v250 = vcombine.low %v211, %v243
    %v251 = vcombine.high %v211, %v243
    %v252 = vcombine.low %v38, %v60
    %v253 = vcombine.high %v38, %v60
    %v255 = vunpack.c.l.s4 1983009808
    %v256 = vunpack.c.0.s8 %v255
    %v257 = vlaneseq
    %v258 = vshrl.u32 %v257, 7
    %v259 = vsub.s32 %v256, %v258
    %v260 = vrot.slane %v252, %v259
    %v262 = vunpack.c.l.s4 1983009808
    %v263 = vunpack.c.0.s8 %v262
    %v264 = vlaneseq
    %v265 = vshrl.u32 %v264, 7
    %v266 = vsub.s32 %v263, %v265
    %v267 = vrot.slane %v253, %v266
    %v268 = vcombine.low %v49, %v71
    %v269 = vcombine.high %v49, %v71
    %v271 = vunpack.c.l.s4 1983009808
    %v272 = vunpack.c.0.s8 %v271
    %v273 = vlaneseq
    %v274 = vshrl.u32 %v273, 7
    %v275 = vsub.s32 %v272, %v274
    %v276 = vrot.slane %v268, %v275
    %v278 = vunpack.c.l.s4 1983009808
    %v279 = vunpack.c.0.s8 %v278
    %v280 = vlaneseq
    %v281 = vshrl.u32 %v280, 7
    %v282 = vsub.s32 %v279, %v281
    %v283 = vrot.slane %v269, %v282
    %v284 = vcombine.low %v82, %v104
    %v285 = vcombine.high %v82, %v104
    %v287 = vunpack.c.l.s4 1983009808
    %v288 = vunpack.c.0.s8 %v287
    %v289 = vlaneseq
    %v290 = vshrl.u32 %v289, 7
    %v291 = vsub.s32 %v288, %v290
    %v292 = vrot.slane %v284, %v291
    %v294 = vunpack.c.l.s4 1983009808
    %v295 = vunpack.c.0.s8 %v294
    %v296 = vlaneseq
    %v297 = vshrl.u32 %v296, 7
    %v298 = vsub.s32 %v295, %v297
    %v299 = vrot.slane %v285, %v298
    %v300 = vcombine.low %v93, %v115
    %v301 = vcombine.high %v93, %v115
    %v303 = vunpack.c.l.s4 1983009808
    %v304 = vunpack.c.0.s8 %v303
    %v305 = vlaneseq
    %v306 = vshrl.u32 %v305, 7
    %v307 = vsub.s32 %v304, %v306
    %v308 = vrot.slane %v300, %v307
    %v310 = vunpack.c.l.s4 1983009808
    %v311 = vunpack.c.0.s8 %v310
    %v312 = vlaneseq
    %v313 = vshrl.u32 %v312, 7
    %v314 = vsub.s32 %v311, %v313
    %v315 = vrot.slane %v301, %v314
    %v316 = vcombine.low %v260, %v276
    %v317 = vcombine.high %v260, %v276
    %v319 = vunpack.c.l.s4 1934713408
    %v320 = vunpack.c.0.s8 %v319
    %v321 = vlaneseq
    %v322 = vshrl.u32 %v321, 7
    %v323 = vsub.s32 %v320, %v322
    %v324 = vrot.slane %v316, %v323
    %v326 = vunpack.c.l.s4 1934713408
    %v327 = vunpack.c.0.s8 %v326
    %v328 = vlaneseq
    %v329 = vshrl.u32 %v328, 7
    %v330 = vsub.s32 %v327, %v329
    %v331 = vrot.slane %v317, %v330
    %v332 = vcombine.low %v267, %v283
    %v333 = vcombine.high %v267, %v283
    %v335 = vunpack.c.l.s4 1934713408
    %v336 = vunpack.c.0.s8 %v335
    %v337 = vlaneseq
    %v338 = vshrl.u32 %v337, 7
    %v339 = vsub.s32 %v336, %v338
    %v340 = vrot.slane %v332, %v339
    %v342 = vunpack.c.l.s4 1934713408
    %v343 = vunpack.c.0.s8 %v342
    %v344 = vlaneseq
    %v345 = vshrl.u32 %v344, 7
    %v346 = vsub.s32 %v343, %v345
    %v347 = vrot.slane %v333, %v346
    %v348 = vcombine.low %v292, %v308
    %v349 = vcombine.high %v292, %v308
    %v351 = vunpack.c.l.s4 1934713408
    %v352 = vunpack.c.0.s8 %v351
    %v353 = vlaneseq
    %v354 = vshrl.u32 %v353, 7
    %v355 = vsub.s32 %v352, %v354
    %v356 = vrot.slane %v348, %v355
    %v358 = vunpack.c.l.s4 1934713408
    %v359 = vunpack.c.0.s8 %v358
    %v360 = vlaneseq
    %v361 = vshrl.u32 %v360, 7
    %v362 = vsub.s32 %v359, %v361
    %v363 = vrot.slane %v349, %v362
    %v364 = vcombine.low %v299, %v315
    %v365 = vcombine.high %v299, %v315
    %v367 = vunpack.c.l.s4 1934713408
    %v368 = vunpack.c.0.s8 %v367
    %v369 = vlaneseq
    %v370 = vshrl.u32 %v369, 7
    %v371 = vsub.s32 %v368, %v370
    %v372 = vrot.slane %v364, %v371
    %v374 = vunpack.c.l.s4 1934713408
    %v375 = vunpack.c.0.s8 %v374
    %v376 = vlaneseq
    %v377 = vshrl.u32 %v376, 7
    %v378 = vsub.s32 %v375, %v377
    %v379 = vrot.slane %v365, %v378
    %v380 = vcombine.low %v324, %v356
    %v381 = vcombine.high %v324, %v356
    %v382 = vcombine.low %v331, %v363
    %v383 = vcombine.high %v331, %v363
    %v384 = vcombine.low %v340, %v372
    %v385 = vcombine.high %v340, %v372
    %v386 = vcombine.low %v347, %v379
    %v387 = vcombine.high %v347, %v379
    %389 = vrot.lane.b32.xlu0 %v245, 8
    %v390 = vpop.permute.xlu0 %389
    %393 = vrot.lane.b32.xlu0 %v246, 16
    %v394 = vpop.permute.xlu0 %393
    %397 = vrot.lane.b32.xlu0 %v247, 24
    %v398 = vpop.permute.xlu0 %397
    %401 = vrot.lane.b32.xlu0 %v248, 32
    %v402 = vpop.permute.xlu0 %401
    %405 = vrot.lane.b32.xlu0 %v249, 40
    %v406 = vpop.permute.xlu0 %405
    %409 = vrot.lane.b32.xlu0 %v250, 48
    %v410 = vpop.permute.xlu0 %409
    %413 = vrot.lane.b32.xlu0 %v251, 56
    %v414 = vpop.permute.xlu0 %413
    %417 = vrot.lane.b32.xlu0 %v380, 64
    %v418 = vpop.permute.xlu0 %417
    %421 = vrot.lane.b32.xlu0 %v381, 72
    %v422 = vpop.permute.xlu0 %421
    %425 = vrot.lane.b32.xlu0 %v382, 80
    %v426 = vpop.permute.xlu0 %425
    %429 = vrot.lane.b32.xlu0 %v383, 88
    %v430 = vpop.permute.xlu0 %429
    %433 = vrot.lane.b32.xlu0 %v384, 96
    %v434 = vpop.permute.xlu0 %433
    %437 = vrot.lane.b32.xlu0 %v385, 104
    %v438 = vpop.permute.xlu0 %437
    %441 = vrot.lane.b32.xlu0 %v386, 112
    %v442 = vpop.permute.xlu0 %441
    %445 = vrot.lane.b32.xlu0 %v387, 120
    %v446 = vpop.permute.xlu0 %445
    %vm448 = vcmask 64512
    %v449 = vsel %vm448, %v244, %v390
    %vm450 = vcmask 130048
    %v451 = vsel %vm450, %v449, %v394
    %vm452 = vcmask 195584
    %v453 = vsel %vm452, %v451, %v398
    %vm454 = vcmask 261120
    %v455 = vsel %vm454, %v453, %v402
    %vm456 = vcmask 326656
    %v457 = vsel %vm456, %v455, %v406
    %vm458 = vcmask 392192
    %v459 = vsel %vm458, %v457, %v410
    %vm460 = vcmask 457728
    %v461 = vsel %vm460, %v459, %v414
    %vm462 = vcmask 523264
    %v463 = vsel %vm462, %v461, %v418
    %vm464 = vcmask 588800
    %v465 = vsel %vm464, %v463, %v422
    %vm466 = vcmask 654336
    %v467 = vsel %vm466, %v465, %v426
    %vm468 = vcmask 719872
    %v469 = vsel %vm468, %v467, %v430
    %vm470 = vcmask 785408
    %v471 = vsel %vm470, %v469, %v434
    %vm472 = vcmask 850944
    %v473 = vsel %vm472, %v471, %v438
    %vm474 = vcmask 916480
    %v475 = vsel %vm474, %v473, %v442
    %vm476 = vcmask 982016
    %v477 = vsel %vm476, %v475, %v446
    %v478 = vld [vmem:[%s2] sm:$0x1]
    %v480 = vlaneseq
    %v481 = vshrl.u32 %v480, 7
    %v482 = vsub.s32 0, %v481
    %v483 = vrot.slane %v478, %v482
    %v485 = vmul.f32 %v477, %v483
    %v486 = vld [vmem:[%s1] sm:$0x1]
    %v488 = vlaneseq
    %v489 = vshrl.u32 %v488, 7
    %v490 = vsub.s32 0, %v489
    %v491 = vrot.slane %v486, %v490
    %v493 = vsub.f32 %v485, %v491
    %v494 = vadd.f32 %v477, 1.0
    %v495 = vadd.f32 %v494, 1.0
    %v496 = vmul.f32 %v494, %v495
    %v497 = vadd.f32 %v494, 2.0
    %v498 = vmul.f32 %v496, %v497
    %v499 = vadd.f32 %v494, 3.0
    %v500 = vmul.f32 %v498, %v499
    %v501 = vlog2.pop %v500
    %v502 = vmul.f32 %v501, 0.6931472
    %v503 = vadd.f32 %v494, 4.0
    %v504 = vrcp.pop %v503
    %v505 = vmul.f32 %v504, %v504
    %v506 = vmul.f32 %v505, 0.0007936508
    %v507 = vsub.f32 0.0027777778, %v506
    %v508 = vmul.f32 %v505, %v507
    %v509 = vsub.f32 0.083333336, %v508
    %v510 = vmul.f32 %v504, %v509
    %v511 = vsub.f32 %v503, 0.5
    %v512 = vlog2.pop %v503
    %v513 = vmul.f32 %v512, 0.6931472
    %v514 = vmul.f32 %v511, %v513
    %v515 = vsub.f32 %v514, %v503
    %v516 = vadd.f32 %v515, 0.9189385
    %v517 = vadd.f32 %v516, %v510
    %v518 = vsub.f32 %v517, %v502
    %v519 = vsub.f32 %v493, %v518
    %520 = vst [vmem:[#allocation5] sm:$0xff] %v519
    // Predicated region
    $region18: #{tpu_custom_call.1} parent=1 // pred_check
      _
    $region19: #{tpu_custom_call.1} parent=1 // pred_check_branch
      %522 = sbr.rel (0) target = $region21
    $region20: #{tpu_custom_call.1} parent=1 // pred_region
      %s524 = ssub.s32 128, 128
      %525 = vsyncadd [#allocation4], %s524
      %s527 = sshll.u32 [#allocation5], 4
      %s528 = int_to_ptr.vmem [resolvable:$true] %s527
      %530 = dma.vmem_to_hbm [thread:$0]  %s528, 128, %s3, [#allocation4]
    $region21: #{tpu_custom_call.1} parent=1 // pred_fallthru
      _
    // Predicated region
    $region22: #{tpu_custom_call.1} parent=1 // pred_check
      _
    $region23: #{tpu_custom_call.1} parent=1 // pred_check_branch
      %532 = sbr.rel (0) target = $region25
    $region24: #{tpu_custom_call.1} parent=1 // pred_region
      %533 = dma.done [#allocation4], 128
    $region25: #{tpu_custom_call.1} parent=1 // pred_fallthru
      _
    %534 = vsyncpa [#allocation3], 1
    %535 = vsyncpa [#allocation4], 1

</llo_original>
